<compile_context>
chip_gen: v6e
topology: v6e:2x2x1
jax: 0.10.0
libtpu: 0.0.40
codegen_flags: <defaults>
</compile_context>

<pallas_src>
import functools

import jax
import jax.numpy as jnp
from jax.experimental import pallas as pl
from jax.experimental.pallas import tpu as pltpu

BN_EPS = 1e-5


# ----------------------------- sizing helpers ------------------------------ #

def _round_up(x, m):
    return ((x + m - 1) // m) * m


def _tpu_vmem_bytes():
    try:
        return int(pltpu.get_tpu_info().vmem_capacity_bytes)
    except Exception:
        return 64 * 1024 * 1024            # conservative (v7x per-core VMEM)


def _vmem_limit_bytes():
    # ~3/4 of physical VMEM: 48 MiB on v7x (64 MiB parts), 64 MiB on v5e/v6e.
    phys = _tpu_vmem_bytes()
    return int(min(64 * 1024 * 1024, max(32 * 1024 * 1024, phys * 3 // 4)))


def _pick_batch_tile(n, f, *, in_itemsize, out_cols, resident_bytes=0,
                     block_rows=None):
    """Batch-tile rows: either a multiple of 128 (< n) or exactly n.

    Both choices satisfy the TPU (8,128)/(16,128) tiling constraint for any
    input dtype (a full-extent block is always legal).
    """
    if block_rows is not None:
        tb = max(128, _round_up(block_rows, 128))
    else:
        usable = _vmem_limit_bytes() * 3 // 4 - resident_bytes
        usable = max(usable, 2 * 1024 * 1024)
        # x1 + x2 double-buffered + double-buffered output tile, per batch row
        per_row = 2 * 2 * f * in_itemsize + 2 * out_cols * 4
        tb = (usable // per_row) // 128 * 128
        tb = max(128, min(tb, 1024))
    if n >= 256:                           # keep >= 2 grid steps (v7x megacore)
        tb = min(tb, _round_up(pl.cdiv(n, 2), 128))
    if tb >= n:
        tb = n                             # single full-extent block
    return tb


# ----------------------------- kernels ------------------------------------- #

def _sub_nl_sum_kernel(*refs, nonlinearity, use_bn):
    """out[i] = sum_f BN_eval(nl(x1 - x2))[i, f]; BN folded to scale/shift."""
    if use_bn:
        x1_ref, x2_ref, scale_ref, shiftsum_ref, o_ref = refs
    else:
        x1_ref, x2_ref, o_ref = refs
    # inputs arrive in their HBM dtype (possibly bf16); compute in f32
    d = x1_ref[...].astype(jnp.float32) - x2_ref[...].astype(jnp.float32)
    if nonlinearity == "square":
        d = d * d
    elif nonlinearity == "abs":
        d = jnp.abs(d)
    if use_bn:
        # sum_f (d*scale + shift) = sum_f d*scale  +  sum_f shift
        s = jnp.sum(d * scale_ref[...], axis=1, keepdims=True) + shiftsum_ref[...]
    else:
        s = jnp.sum(d, axis=1, keepdims=True)
    o_ref[...] = s.astype(o_ref.dtype)


def _sub_nl_fc_kernel(x1_ref, x2_ref, w_ref, b_ref, o_ref, *, nonlinearity):
    """out = BN_eval(nl(x1 - x2)) @ W^T + b, with BN pre-folded into
    w_ref (F, tc) [bf16] and b_ref (1, tc) [f32] by the wrapper."""
    d = x1_ref[...].astype(jnp.float32) - x2_ref[...].astype(jnp.float32)
    if nonlinearity == "square":
        d = d * d
    elif nonlinearity == "abs":
        d = jnp.abs(d)
    # single bf16 MXU pass, f32 accumulation (matches default f32 precision)
    acc = jnp.dot(d.astype(jnp.bfloat16), w_ref[...],
                  preferred_element_type=jnp.float32)
    o_ref[...] = (acc + b_ref[...]).astype(o_ref.dtype)


# ----------------------------- module wrapper ------------------------------ #

class EltwiseSubEmbed:
    def __init__(self, nonlinearity="square", use_batch_norm=False,
                 use_classifier=False, num_features=0, num_classes=0,
                 key=None, block_rows=None, block_cols=None):
        if nonlinearity is not None and nonlinearity not in ["square", "abs"]:
            raise KeyError("Unknown nonlinearity:", nonlinearity)
        self.nonlinearity = nonlinearity
        self.use_batch_norm = use_batch_norm
        self.use_classifier = use_classifier
        self.num_features = num_features
        self.num_classes = num_classes
        self.block_rows = block_rows        # optional batch-tile override
        self.block_cols = block_cols        # optional class-tile override

        if self.use_batch_norm:
            # nn.BatchNorm1d init: weight=1, bias=0, running_mean=0, running_var=1
            self.bn_weight = jnp.ones((num_features,), jnp.float32)
            self.bn_bias = jnp.zeros((num_features,), jnp.float32)
            self.bn_running_mean = jnp.zeros((num_features,), jnp.float32)
            self.bn_running_var = jnp.ones((num_features,), jnp.float32)

        if self.use_classifier:
            assert num_features > 0 and num_classes > 0
            if key is None:
                key = jax.random.PRNGKey(42)
            # nn.Linear: weight ~ N(0, 0.001), bias = 0
            self.fc_weight = 0.001 * jax.random.normal(
                key, (num_classes, num_features), jnp.float32)     # (C, F)
            self.fc_bias = jnp.zeros((num_classes,), jnp.float32)

    # eval-mode BN folded to a per-feature affine:  y = d * scale + shift
    def _bn_scale_shift(self, f):
        if self.use_batch_norm:
            inv_std = 1.0 / jnp.sqrt(self.bn_running_var + BN_EPS)
            scale = self.bn_weight * inv_std
            shift = self.bn_bias - self.bn_running_mean * scale
        else:
            scale = jnp.ones((f,), jnp.float32)
            shift = jnp.zeros((f,), jnp.float32)
        return scale, shift

    # ------------------------------------------------------------------ #
    def __call__(self, x1, x2):
        assert x1.shape == x2.shape and x1.ndim == 2
        if x1.dtype != x2.dtype:            # rare: unify before streaming
            x1 = x1.astype(jnp.float32)
            x2 = x2.astype(jnp.float32)
        n, f = x1.shape
        in_itemsize = x1.dtype.itemsize     # stream inputs in incoming dtype
        vmem_limit = _vmem_limit_bytes()
        scale, shift = self._bn_scale_shift(f)

        if self.use_classifier:
            c = self.num_classes
            c_pad = _round_up(c, 128)       # lane-dense output / MXU columns
            w_t = self.fc_weight.T                                   # (F, C)
            # fold eval-mode BN:  (d*scale + shift) @ W^T + b
            #                   = d @ (scale[:,None]*W^T)  +  (shift@W^T + b)
            b_fold = jnp.dot(shift, w_t,
                             precision=jax.lax.Precision.HIGHEST) + self.fc_bias
            w_fold = w_t * scale[:, None]
            if c_pad != c:
                w_fold = jnp.pad(w_fold, ((0, 0), (0, c_pad - c)))
                b_fold = jnp.pad(b_fold, ((0, c_pad - c),))
            # bf16 W halves its HBM/VMEM footprint; default-precision f32 matmul
            # is a single bf16 pass anyway, so accuracy is unchanged in practice.
            w_fold = w_fold.astype(jnp.bfloat16)
            b_fold = b_fold.reshape(1, c_pad).astype(jnp.float32)

            # ---- class tiling: keep W comfortably inside VMEM ------------- #
            usable = vmem_limit * 3 // 4
            if self.block_cols is not None:
                tc = min(c_pad, max(128, _round_up(self.block_cols, 128)))
            elif f * c_pad * 2 <= usable // 3:     # W fits resident
                tc = c_pad
            else:                                   # tile classes (W dbl-buffered)
                tc = min(c_pad,
                         max(128, (usable // 3 // (2 * f * 2)) // 128 * 128))
            c_tiles = pl.cdiv(c_pad, tc)

            if c_tiles == 1:
                resident = f * c_pad * 2 + c_pad * 4      # single-buffered W+bias
            else:
                resident = 2 * (f * tc * 2 + tc * 4)      # double-buffered tiles
            tb = _pick_batch_tile(n, f, in_itemsize=in_itemsize, out_cols=tc,
                                  resident_bytes=resident,
                                  block_rows=self.block_rows)
            b_tiles = pl.cdiv(n, tb)

            # order axes so the larger of {x1+x2, W} is streamed exactly once
            batch_major = (c_tiles == 1) or (2 * n * f * in_itemsize
                                             >= f * c_pad * 2)

            kernel = functools.partial(_sub_nl_fc_kernel,
                                       nonlinearity=self.nonlinearity)
            x_reads = 1 if batch_major else c_tiles
            w_reads = 1 if (c_tiles == 1 or not batch_major) else b_tiles
            cost = pl.CostEstimate(
                flops=2 * n * f * c_pad + 2 * n * f,
                transcendentals=0,
                bytes_accessed=(x_reads * 2 * n * f * in_itemsize
                                + w_reads * f * c_pad * 2
                                + c_pad * 4 + n * c_pad * 4))
            cparams = pltpu.CompilerParams(
                dimension_semantics=(("parallel",) if c_tiles == 1
                                     else ("parallel", "parallel")),
                vmem_limit_bytes=vmem_limit)

            def launch(single_buffer):
                # grid-invariant W / bias: single VMEM buffer (no pointless
                # double-buffering) when supported
                const_kw = ({"pipeline_mode": pl.Buffered(1)}
                            if single_buffer else {})
                if c_tiles == 1:
                    grid = (b_tiles,)
                    in_specs = [
                        pl.BlockSpec((tb, f), lambda i: (i, 0)),
                        pl.BlockSpec((tb, f), lambda i: (i, 0)),
                        pl.BlockSpec((f, c_pad), lambda i: (0, 0), **const_kw),
                        pl.BlockSpec((1, c_pad), lambda i: (0, 0), **const_kw),
                    ]
                    out_spec = pl.BlockSpec((tb, c_pad), lambda i: (i, 0))
                elif batch_major:
                    grid = (b_tiles, c_tiles)       # x1/x2 read exactly once
                    in_specs = [
                        pl.BlockSpec((tb, f), lambda i, j: (i, 0)),
                        pl.BlockSpec((tb, f), lambda i, j: (i, 0)),
                        pl.BlockSpec((f, tc), lambda i, j: (0, j)),
                        pl.BlockSpec((1, tc), lambda i, j: (0, j)),
                    ]
                    out_spec = pl.BlockSpec((tb, tc), lambda i, j: (i, j))
                else:
                    grid = (c_tiles, b_tiles)       # W read exactly once
                    in_specs = [
                        pl.BlockSpec((tb, f), lambda j, i: (i, 0)),
                        pl.BlockSpec((tb, f), lambda j, i: (i, 0)),
                        pl.BlockSpec((f, tc), lambda j, i: (0, j)),
                        pl.BlockSpec((1, tc), lambda j, i: (0, j)),
                    ]
                    out_spec = pl.BlockSpec((tb, tc), lambda j, i: (i, j))
                return pl.pallas_call(
                    kernel,
                    out_shape=jax.ShapeDtypeStruct((n, c_pad), jnp.float32),
                    grid=grid,
                    in_specs=in_specs,
                    out_specs=out_spec,
                    compiler_params=cparams,
                    cost_estimate=cost,
                )(x1, x2, w_fold, b_fold)

            if c_tiles == 1:
                try:
                    out = launch(True)
                except Exception:      # pipeline_mode unsupported -> default
                    out = launch(False)
            else:
                out = launch(False)
            return out if c_pad == c else out[:, :c]

        # --- no classifier: (optional eval-mode BN) then sum over features ---
        use_bn = bool(self.use_batch_norm)
        resident = (f * 4 + 4) if use_bn else 0
        tb = _pick_batch_tile(n, f, in_itemsize=in_itemsize, out_cols=1,
                              resident_bytes=resident,
                              block_rows=self.block_rows)
        grid = (pl.cdiv(n, tb),)      # ragged last block handled by Pallas
        kernel = functools.partial(_sub_nl_sum_kernel,
                                   nonlinearity=self.nonlinearity,
                                   use_bn=use_bn)
        in_specs = [pl.BlockSpec((tb, f), lambda i: (i, 0)),
                    pl.BlockSpec((tb, f), lambda i: (i, 0))]
        operands = [x1, x2]
        if use_bn:
            in_specs += [pl.BlockSpec((1, f), lambda i: (0, 0)),   # BN scale row
                         pl.BlockSpec((1, 1), lambda i: (0, 0))]   # sum(shift)
            operands += [scale.reshape(1, f), jnp.sum(shift).reshape(1, 1)]
        cost = pl.CostEstimate(
            flops=(4 if use_bn else 3) * n * f,
            transcendentals=0,
            bytes_accessed=(2 * n * f * in_itemsize + 4 * n
                            + (4 * f + 4 if use_bn else 0)))
        out = pl.pallas_call(
            kernel,
            out_shape=jax.ShapeDtypeStruct((n, 1), jnp.float32),
            grid=grid,
            in_specs=in_specs,
            out_specs=pl.BlockSpec((tb, 1), lambda i: (i, 0)),
            compiler_params=pltpu.CompilerParams(
                dimension_semantics=("parallel",),
                vmem_limit_bytes=vmem_limit),
            cost_estimate=cost,
        )(*operands)
        return out[:, 0]               # match torch .sum(1) -> (N,)


# ----------------------------- reference / main ---------------------------- #

def _ref(x1, x2, mod):
    x1 = x1.astype(jnp.float32)
    x2 = x2.astype(jnp.float32)
    d = x1 - x2
    if mod.nonlinearity == "square":
        d = d * d
    elif mod.nonlinearity == "abs":
        d = jnp.abs(d)
    if mod.use_batch_norm:
        inv = 1.0 / jnp.sqrt(mod.bn_running_var + BN_EPS)
        d = (d - mod.bn_running_mean) * inv * mod.bn_weight + mod.bn_bias
    if mod.use_classifier:
        return jnp.dot(d, mod.fc_weight.T,
                       precision=jax.lax.Precision.HIGHEST) + mod.fc_bias
    return d.sum(axis=1)


if __name__ == "__main__":
    F, C = 128, 16
    key = jax.random.PRNGKey(0)
    k1, k2, k3, k4, kw, kb = jax.random.split(key, 6)

    # 1) default config: square nonlinearity, plain sum over features
    N = 8
    x1 = jax.random.normal(k1, (N, F), jnp.float32)
    x2 = jax.random.normal(k2, (N, F), jnp.float32)
    mod_sum = EltwiseSubEmbed(nonlinearity="square")
    out = jax.block_until_ready(mod_sum(x1, x2))
    assert out.shape == (N,)
    assert jnp.allclose(out, _ref(x1, x2, mod_sum), rtol=1e-4, atol=1e-3)

    # 2) square + BN + classifier (reid verification config), non-trivial
    #    "trained" BN statistics to exercise the weight/bias folding
    mod_fc = EltwiseSubEmbed(nonlinearity="square", use_batch_norm=True,
                             use_classifier=True, num_features=F,
                             num_classes=C, key=kw, block_rows=128)
    kb1, kb2, kb3, kb4 = jax.random.split(kb, 4)
    mod_fc.bn_weight = 1.0 + 0.3 * jax.random.normal(kb1, (F,), jnp.float32)
    mod_fc.bn_bias = 0.5 * jax.random.normal(kb2, (F,), jnp.float32)
    mod_fc.bn_running_mean = jax.random.normal(kb3, (F,), jnp.float32)
    mod_fc.bn_running_var = jax.random.uniform(kb4, (F,), jnp.float32,
                                               minval=0.5, maxval=2.0)
    out_fc = jax.block_until_ready(mod_fc(x1, x2))
    assert out_fc.shape == (N, C)
    # tolerance covers the single-bf16-pass MXU matmul + bf16-stored folded W
    assert jnp.allclose(out_fc, _ref(x1, x2, mod_fc), rtol=2e-2, atol=5e-3)

    # 3) same classifier, larger batch -> multi-step grid + ragged last block
    N2 = 200                               # tb=128 -> grid=(2,), edge block = 72 rows
    x1b = jax.random.normal(k3, (N2, F), jnp.float32)
    x2b = jax.random.normal(k4, (N2, F), jnp.float32)
    out_fcb = jax.block_until_ready(mod_fc(x1b, x2b))
    assert out_fcb.shape == (N2, C)
    assert jnp.allclose(out_fcb, _ref(x1b, x2b, mod_fc), rtol=2e-2, atol=5e-3)

    # 4) abs nonlinearity + BN, no classifier, ragged multi-step grid
    mod_abs = EltwiseSubEmbed(nonlinearity="abs", use_batch_norm=True,
                              num_features=F, block_rows=128)
    mod_abs.bn_weight = mod_fc.bn_weight
    mod_abs.bn_bias = mod_fc.bn_bias
    mod_abs.bn_running_mean = mod_fc.bn_running_mean
    mod_abs.bn_running_var = mod_fc.bn_running_var
    out_abs = jax.block_until_ready(mod_abs(x1b, x2b))
    assert out_abs.shape == (N2,)
    assert jnp.allclose(out_abs, _ref(x1b, x2b, mod_abs), rtol=1e-4, atol=1e-3)

    # 5) bf16 inputs streamed as-is (no wrapper upcast), sum path
    x1h = x1b.astype(jnp.bfloat16)
    x2h = x2b.astype(jnp.bfloat16)
    out_h = jax.block_until_ready(mod_sum(x1h, x2h))
    assert out_h.shape == (N2,)
    assert jnp.allclose(out_h, _ref(x1h, x2h, mod_sum), rtol=1e-4, atol=1e-3)

    # 6) class-tiled classifier (forced tc=128, C=300 -> c_pad=384, 3 class
    #    tiles), batch-major 2-D grid (x1/x2 streamed exactly once)
    C2 = 300
    mod_big = EltwiseSubEmbed(nonlinearity="square", use_batch_norm=True,
                              use_classifier=True, num_features=F,
                              num_classes=C2, key=kw, block_rows=128,
                              block_cols=128)
    mod_big.bn_weight = mod_fc.bn_weight
    mod_big.bn_bias = mod_fc.bn_bias
    mod_big.bn_running_mean = mod_fc.bn_running_mean
    mod_big.bn_running_var = mod_fc.bn_running_var
    out_big = jax.block_until_ready(mod_big(x1b, x2b))
    assert out_big.shape == (N2, C2)
    assert jnp.allclose(out_big, _ref(x1b, x2b, mod_big), rtol=2e-2, atol=5e-3)

    # 7) class-tiled classifier, tiny bf16 batch -> class-major 2-D grid
    #    (W streamed exactly once), no BN
    mod_big2 = EltwiseSubEmbed(nonlinearity="square", use_classifier=True,
                               num_features=F, num_classes=C2, key=kw,
                               block_cols=128)
    x1s = x1.astype(jnp.bfloat16)
    x2s = x2.astype(jnp.bfloat16)
    out_big2 = jax.block_until_ready(mod_big2(x1s, x2s))
    assert out_big2.shape == (N, C2)
    assert jnp.allclose(out_big2, _ref(x1s, x2s, mod_big2), rtol=2e-2, atol=5e-3)

    print("KERNEL_OK")
</pallas_src>

<mosaic_0001>
module attributes {stable_mosaic.version = 11 : i64} {
  func.func @_sub_nl_sum_kernel(%arg0: i32, %arg1: memref<8x128xf32, #tpu.memory_space<vmem>>, %arg2: memref<8x128xf32, #tpu.memory_space<vmem>>, %arg3: memref<8x1xf32, #tpu.memory_space<vmem>>) attributes {dimension_semantics = [#tpu.dimension_semantics<parallel>], iteration_bounds = array<i64: 1>, scalar_prefetch = 0 : i64, scratch_operands = 0 : i64, tpu.core_type = #tpu.core_type<tc>, window_params = [{transform_indices = @transform_0, window_bounds = array<i64: 8, 128>}, {transform_indices = @transform_1, window_bounds = array<i64: 8, 128>}, {transform_indices = @transform_2, window_bounds = array<i64: 8, 1>}]} {
    %c0 = arith.constant 0 : index
    %c0_0 = arith.constant 0 : index
    %0 = vector.load %arg1[%c0, %c0_0] : memref<8x128xf32, #tpu.memory_space<vmem>>, vector<8x128xf32>
    %c0_1 = arith.constant 0 : index
    %c0_2 = arith.constant 0 : index
    %1 = vector.load %arg2[%c0_1, %c0_2] : memref<8x128xf32, #tpu.memory_space<vmem>>, vector<8x128xf32>
    %2 = arith.subf %0, %1 : vector<8x128xf32>
    %3 = arith.mulf %2, %2 : vector<8x128xf32>
    %cst = arith.constant dense<0.000000e+00> : vector<8xf32>
    %4 = vector.multi_reduction <add>, %3, %cst [1] : vector<8x128xf32> to vector<8xf32>
    %5 = vector.shape_cast %4 : vector<8xf32> to vector<8x1xf32>
    %c0_3 = arith.constant 0 : index
    %c0_4 = arith.constant 0 : index
    %6 = vector.load %arg3[%c0_3, %c0_4] : memref<8x1xf32, #tpu.memory_space<vmem>>, vector<8x1xf32>
    tpu.vector_store %arg3[%c0_3, %c0_4], %5 {strides = array<i32>} : memref<8x1xf32, #tpu.memory_space<vmem>>, vector<8x1xf32>,
    return
  }
  func.func @transform_0(%arg0: i32) -> (i32, i32) {
    %c0_i32 = arith.constant 0 : i32
    %c0_i32_0 = arith.constant 0 : i32
    return %arg0, %c0_i32 : i32, i32
  }
  func.func @transform_1(%arg0: i32) -> (i32, i32) {
    %c0_i32 = arith.constant 0 : i32
    %c0_i32_0 = arith.constant 0 : i32
    return %arg0, %c0_i32 : i32, i32
  }
  func.func @transform_2(%arg0: i32) -> (i32, i32) {
    %c0_i32 = arith.constant 0 : i32
    %c0_i32_0 = arith.constant 0 : i32
    return %arg0, %c0_i32 : i32, i32
  }
}

</mosaic_0001>

<llo_original>
// kernel: tpu_custom_call.1
$region0: #{tpu_custom_call.1}
  #allocation0 [shape = 'u32[]', space=smem, size = 0x4, offset = 0x4, fixed_abs, tag = 'smem constant byte address 0x4 - core index']
  #allocation1 [shape = 'u32[144,128]{1,0:T(1,128)}', space=vmem, size = 0x12000, scoped, tag = 'internal scratch']
  %s0 = inlined_call_operand.hbm [shape: f32[8,128], index: 0, kind: input, shape index: {}]
  %s1 = inlined_call_operand.hbm [shape: f32[8,128], index: 1, kind: input, shape index: {}]
  %s2 = inlined_call_operand.vmem [shape: f32[8,1], index: 2, kind: output, shape index: {}]
  %s3 = sld [smem:[#allocation0]]
  $region26: #{tpu_custom_call.1} parent=0
    _
  %s5 = ssub.s32 1, %s3
  %s6 = scalar_select 0, %s5, %s3
  $region1: #{tpu_custom_call.1} parent=0
    #allocation2 [shape = 'u8[4096]{0}', space=vmem, size = 0x1000, scoped, tag = 'input window, operand 0, single buffered']
    #allocation3 [shape = 's32[1]{0}', space=sflag, size = 0x4, scoped, tag = 'scoped memory for tpu_custom_call.1']
    #allocation4 [shape = 'u8[4096]{0}', space=vmem, size = 0x1000, scoped, tag = 'input window, operand 1, single buffered']
    #allocation5 [shape = 's32[1]{0}', space=sflag, size = 0x4, scoped, tag = 'scoped memory for tpu_custom_call.1']
    %7 = vsyncpa [#allocation3], 0
    %8 = vsyncpa [#allocation5], 0
    // Predicated region
    $region2: #{tpu_custom_call.1} parent=1 // pred_check
      _
    $region3: #{tpu_custom_call.1} parent=1 // pred_check_branch
      %10 = sbr.rel (0) target = $region5
    $region4: #{tpu_custom_call.1} parent=1 // pred_region
      %s12 = ssub.s32 128, 128
      %13 = vsyncadd [#allocation3], %s12
      %s15 = sshll.u32 [#allocation2], 4
      %s16 = int_to_ptr.vmem [resolvable:$true] %s15
      %18 = dma.hbm_to_vmem [thread:$0]  %s0, 128, %s16, [#allocation3]
    $region5: #{tpu_custom_call.1} parent=1 // pred_fallthru
      _
    // Predicated region
    $region6: #{tpu_custom_call.1} parent=1 // pred_check
      _
    $region7: #{tpu_custom_call.1} parent=1 // pred_check_branch
      %20 = sbr.rel (0) target = $region9
    $region8: #{tpu_custom_call.1} parent=1 // pred_region
      %s22 = ssub.s32 128, 128
      %23 = vsyncadd [#allocation5], %s22
      %s25 = sshll.u32 [#allocation4], 4
      %s26 = int_to_ptr.vmem [resolvable:$true] %s25
      %28 = dma.hbm_to_vmem [thread:$0]  %s1, 128, %s26, [#allocation5]
    $region9: #{tpu_custom_call.1} parent=1 // pred_fallthru
      _
    // Predicated region
    $region10: #{tpu_custom_call.1} parent=1 // pred_check
      _
    $region11: #{tpu_custom_call.1} parent=1 // pred_check_branch
      %30 = sbr.rel (0) target = $region13
    $region12: #{tpu_custom_call.1} parent=1 // pred_region
      %31 = dma.done [#allocation3], 128
    $region13: #{tpu_custom_call.1} parent=1 // pred_fallthru
      _
    // Predicated region
    $region14: #{tpu_custom_call.1} parent=1 // pred_check
      _
    $region15: #{tpu_custom_call.1} parent=1 // pred_check_branch
      %33 = sbr.rel (0) target = $region17
    $region16: #{tpu_custom_call.1} parent=1 // pred_region
      %34 = dma.done [#allocation5], 128
    $region17: #{tpu_custom_call.1} parent=1 // pred_fallthru
      _
    %v35 = vld [vmem:[#allocation2] sm:$0xff]
    %v36 = vld [vmem:[#allocation4] sm:$0xff]
    %v37 = vsub.f32 %v35, %v36
    %v38 = vmul.f32 %v37, %v37
    %39 = vadd.xlane.f32.xlu0 %v38
    %v40 = vpop.xlane.xlu0 %39
    %vm41 = vcmask 7168
    %42 = vst.msk [vmem:[%s2] sm:$0xff] %vm41, %v40
    // Predicated region
    $region18: #{tpu_custom_call.1} parent=1 // pred_check
      _
    $region19: #{tpu_custom_call.1} parent=1 // pred_check_branch
      %44 = sbr.rel (0) target = $region21
    $region20: #{tpu_custom_call.1} parent=1 // pred_region
      _
    $region21: #{tpu_custom_call.1} parent=1 // pred_fallthru
      _
    // Predicated region
    $region22: #{tpu_custom_call.1} parent=1 // pred_check
      _
    $region23: #{tpu_custom_call.1} parent=1 // pred_check_branch
      %46 = sbr.rel (0) target = $region25
    $region24: #{tpu_custom_call.1} parent=1 // pred_region
      _
    $region25: #{tpu_custom_call.1} parent=1 // pred_fallthru
      _
    %47 = vsyncpa [#allocation3], 1
    %48 = vsyncpa [#allocation5], 1

</llo_original>
